<compile_context>
chip_gen: v6e
topology: v6e:2x2x1
jax: 0.10.0
libtpu: 0.0.40
codegen_flags: <defaults>
</compile_context>

<pallas_src>
import math

import jax
import jax.numpy as jnp
from jax.experimental import pallas as pl
from jax.experimental.pallas import tpu as pltpu


def make_positional_encoding(d_model: int, max_len: int = 5000) -> jnp.ndarray:
    """Deterministic sinusoidal PE buffer, shape (max_len, d_model), f32."""
    position = jnp.arange(0, max_len, dtype=jnp.float32)[:, None]            # (max_len, 1)
    div_term = jnp.exp(
        jnp.arange(0, d_model, 2, dtype=jnp.float32) * (-math.log(10000.0) / d_model)
    )                                                                         # (ceil(d/2),)
    pe = jnp.zeros((max_len, d_model), dtype=jnp.float32)
    pe = pe.at[:, 0::2].set(jnp.sin(position * div_term))
    pe = pe.at[:, 1::2].set(jnp.cos(position * div_term[: d_model // 2]))
    return pe


def _pe_add_kernel(x_ref, pe_ref, o_ref):
    # x_ref / o_ref: (bB, tN) block; pe_ref: (1, tN) block (broadcast over the
    # sublane/batch axis). Mixed dtypes promote (bf16 + f32 -> f32), matching
    # the PyTorch forward; cast only the sum to the output dtype.
    o_ref[...] = (x_ref[...] + pe_ref[...]).astype(o_ref.dtype)


def _choose_tiles(B: int, N: int, itemsize: int,
                  budget_bytes: int = 2 * 1024 * 1024):
    """Pick a (bB, tN) block whose VMEM footprint is ~budget_bytes.

    Footprint accounts for sublane padding of the batch (second-to-last) dim:
    a (2, tN) f32 block still occupies 8 sublanes per tile in VMEM.
    bB is either the full batch or a multiple of the dtype's sublane packing;
    tN is either the full row or a multiple of 128 lanes (unmasked stores).
    """
    lane = 128
    min_sub = max(8, 32 // max(1, itemsize))        # 8 f32, 16 bf16, 32 int8
    budget_elems = max(lane * min_sub, budget_bytes // max(1, itemsize))

    bB = B if B <= min_sub else min_sub
    bB_pad = max(bB, min_sub)                       # VMEM sublane padding
    if N * bB_pad <= budget_elems and B > bB:
        # Whole rows fit comfortably: fold more batch rows into the block.
        bB = min(B, max(min_sub, (budget_elems // max(1, N)) // min_sub * min_sub))
        bB_pad = max(bB, min_sub)

    if N * bB_pad <= budget_elems:
        tN = N                                      # full extent: always legal
    else:
        tN = min(N, max(lane, (budget_elems // bB_pad) // lane * lane))

    # v7x has 2 TensorCores: make sure there are >= 2 programs when possible
    # so both cores stream HBM (no-op on v5e/v6e).
    if pl.cdiv(N, tN) * pl.cdiv(B, bB) < 2:
        if N >= 2 * lane:
            tN = max(lane, (N // 2) // lane * lane)
        elif B >= 2 * min_sub:
            bB = max(min_sub, (B // 2) // min_sub * min_sub)
    return bB, tN


def positional_encoding_forward_pallas(x: jnp.ndarray, pe: jnp.ndarray,
                                       *, budget_bytes: int = 2 * 1024 * 1024
                                       ) -> jnp.ndarray:
    """x: (B, S, D);  pe: (max_len, D).  Returns x + pe[:S] broadcast over batch."""
    B, S, D = x.shape
    if S > pe.shape[0]:
        raise ValueError(f"seq_len {S} exceeds positional-encoding max_len {pe.shape[0]}")

    N = S * D
    out_dtype = jnp.result_type(x.dtype, pe.dtype)   # PyTorch-style promotion

    # Each batch row of x is contiguous, so flattening (S, D) -> (N,) is pure
    # layout plumbing; pe flattened the same way aligns element-for-element.
    x2 = x.reshape(B, N)
    pe2 = pe[:S, :].reshape(1, N)                     # keep pe in f32

    itemsize = jnp.dtype(x.dtype).itemsize
    bB, tN = _choose_tiles(B, N, itemsize, budget_bytes)
    n_tiles = pl.cdiv(N, tN)
    b_tiles = pl.cdiv(B, bB)

    out = pl.pallas_call(
        _pe_add_kernel,
        out_shape=jax.ShapeDtypeStruct((B, N), out_dtype),
        grid_spec=pltpu.PrefetchScalarGridSpec(
            num_scalar_prefetch=0,
            # Seq(N) tiles on the slow (outer) axis, batch on the fast (inner)
            # axis: pe's block index only changes with the outer axis, so each
            # pe tile is DMA'd once per N tile rather than once per grid step.
            grid=(n_tiles, b_tiles),
            in_specs=[
                pl.BlockSpec((bB, tN), lambda n, b: (b, n)),   # x
                pl.BlockSpec((1, tN), lambda n, b: (0, n)),    # pe (f32)
            ],
            out_specs=pl.BlockSpec((bB, tN), lambda n, b: (b, n)),
        ),
        compiler_params=pltpu.CompilerParams(
            # Both axes independent -> shard across both TensorCores on v7x;
            # neutral on single-TC v5e/v6e.
            dimension_semantics=("parallel", "parallel"),
        ),
    )(x2, pe2)

    return out.reshape(B, S, D)


def positional_encoding_forward(x: jnp.ndarray, pe: jnp.ndarray,
                                *, min_bytes: int = 1 << 20) -> jnp.ndarray:
    """Size-thresholded dispatch: tiny inputs are cheaper as a fused XLA add
    (launch + per-grid-step overhead dominates below ~1 MiB)."""
    B, S, D = x.shape
    if x.size * jnp.dtype(x.dtype).itemsize < min_bytes:
        return x + pe[None, :S, :]
    return positional_encoding_forward_pallas(x, pe)


if __name__ == "__main__":
    # Small shapes consistent with the module: batch=2, seq=8, d_model=32.
    B, S, D = 2, 8, 32
    MAX_LEN = 64  # any max_len >= S behaves identically to 5000 for the forward

    key = jax.random.PRNGKey(0)
    x = jax.random.normal(key, (B, S, D), dtype=jnp.float32)

    pe = make_positional_encoding(D, MAX_LEN)

    # Force the Pallas path (the dispatcher would route this tiny demo to XLA).
    out = positional_encoding_forward_pallas(x, pe)
    out = jax.block_until_ready(out)

    # Reference check in plain JAX (same math as the PyTorch forward).
    ref = x + pe[None, :S, :]
    assert out.shape == (B, S, D)
    assert out.dtype == ref.dtype
    assert jnp.allclose(out, ref, atol=1e-6), "mismatch vs reference"

    # Dispatcher path (XLA fallback at this size) must agree too.
    out2 = jax.block_until_ready(positional_encoding_forward(x, pe))
    assert jnp.allclose(out2, ref, atol=1e-6), "dispatcher mismatch vs reference"

    print("KERNEL_OK")
</pallas_src>

<mosaic_0001>
module attributes {stable_mosaic.version = 11 : i64} {
  func.func @_pe_add_kernel(%arg0: i32, %arg1: i32, %arg2: memref<2x128xf32, #tpu.memory_space<vmem>>, %arg3: memref<1x128xf32, #tpu.memory_space<vmem>>, %arg4: memref<2x128xf32, #tpu.memory_space<vmem>>) attributes {dimension_semantics = [#tpu.dimension_semantics<parallel>, #tpu.dimension_semantics<parallel>], iteration_bounds = array<i64: 2, 1>, scalar_prefetch = 0 : i64, scratch_operands = 0 : i64, tpu.core_type = #tpu.core_type<tc>, window_params = [{transform_indices = @transform_0, window_bounds = array<i64: 2, 128>}, {transform_indices = @transform_1, window_bounds = array<i64: 1, 128>}, {transform_indices = @transform_2, window_bounds = array<i64: 2, 128>}]} {
    %c0 = arith.constant 0 : index
    %c0_0 = arith.constant 0 : index
    %0 = vector.load %arg2[%c0, %c0_0] : memref<2x128xf32, #tpu.memory_space<vmem>>, vector<2x128xf32>
    %c0_1 = arith.constant 0 : index
    %c0_2 = arith.constant 0 : index
    %1 = vector.load %arg3[%c0_1, %c0_2] : memref<1x128xf32, #tpu.memory_space<vmem>>, vector<1x128xf32>
    %2 = vector.broadcast %1 : vector<1x128xf32> to vector<2x128xf32>
    %3 = arith.addf %0, %2 : vector<2x128xf32>
    %c0_3 = arith.constant 0 : index
    %c0_4 = arith.constant 0 : index
    %4 = vector.load %arg4[%c0_3, %c0_4] : memref<2x128xf32, #tpu.memory_space<vmem>>, vector<2x128xf32>
    tpu.vector_store %arg4[%c0_3, %c0_4], %3 {strides = array<i32>} : memref<2x128xf32, #tpu.memory_space<vmem>>, vector<2x128xf32>,
    return
  }
  func.func @transform_0(%arg0: i32, %arg1: i32) -> (i32, i32) {
    %c0_i32 = arith.constant 0 : i32
    return %arg1, %arg0 : i32, i32
  }
  func.func @transform_1(%arg0: i32, %arg1: i32) -> (i32, i32) {
    %c0_i32 = arith.constant 0 : i32
    %c0_i32_0 = arith.constant 0 : i32
    return %c0_i32, %arg0 : i32, i32
  }
  func.func @transform_2(%arg0: i32, %arg1: i32) -> (i32, i32) {
    %c0_i32 = arith.constant 0 : i32
    return %arg1, %arg0 : i32, i32
  }
}

</mosaic_0001>

<llo_original>
// kernel: tpu_custom_call.1
$region0: #{tpu_custom_call.1}
  #allocation0 [shape = 'u32[]', space=smem, size = 0x4, offset = 0x4, fixed_abs, tag = 'smem constant byte address 0x4 - core index']
  #allocation1 [shape = 'u32[144,128]{1,0:T(1,128)}', space=vmem, size = 0x12000, scoped, tag = 'internal scratch']
  %s0 = inlined_call_operand.hbm [shape: f32[2,256], index: 0, kind: input, shape index: {}]
  %s1 = inlined_call_operand.hbm [shape: f32[1,256], index: 1, kind: input, shape index: {}]
  %s2 = inlined_call_operand.hbm [shape: f32[2,256], index: 2, kind: output, shape index: {}]
  %s3 = sld [smem:[#allocation0]]
  $region49: #{tpu_custom_call.1} parent=0
    _
  %s5 = ssub.s32 1, %s3
  %s6 = scalar_select 0, %s5, %s3
  $region1: #{tpu_custom_call.1} parent=0
    #allocation2 [shape = 'u8[2048]{0}', space=vmem, size = 0x800, scoped, tag = 'input window, operand 0']
    #allocation3 [shape = 's32[2]{0}', space=sflag, size = 0x8, scoped, tag = 'scoped memory for tpu_custom_call.1']
    #allocation4 [shape = 's32[2]{0}', space=sflag, size = 0x8, scoped, tag = 'scoped memory for tpu_custom_call.1']
    #allocation5 [shape = 'u8[1024]{0}', space=vmem, size = 0x400, scoped, tag = 'input window, operand 1']
    #allocation6 [shape = 's32[2]{0}', space=sflag, size = 0x8, scoped, tag = 'scoped memory for tpu_custom_call.1']
    #allocation7 [shape = 'u8[2048]{0}', space=vmem, size = 0x800, scoped, tag = 'output window, operand 0']
    %7 = vsyncpa [#allocation3], 0
    %s8 = scalar_lea.sflag [#allocation3], 1
    %9 = vsyncpa %s8, 0
    %10 = vsyncpa [#allocation6], 0
    %s11 = scalar_lea.sflag [#allocation6], 1
    %12 = vsyncpa %s11, 0
    %13 = vsyncpa [#allocation4], 0
    %s14 = scalar_lea.sflag [#allocation4], 1
    %15 = vsyncpa %s14, 0
    loop: start=0, step=1, limit=4
    $region2: #{tpu_custom_call.1} parent=1 // loop_pre_header
      _
    $region3: #{tpu_custom_call.1} parent=1 // loop_header
      %s17 = sphi 0, %s21
      %p18 = scmp.ge.s32.totalorder %s17, 4
      %s24 = sphi 0, %s36
      %s25 = sphi 0, %s32
      %s26 = sphi 0, %s24
      %s27 = sphi 0, %s25
      %s28 = sphi 0, %s26
      %s29 = sphi 0, %s27
      %s41 = sphi 0, %s43
      %s44 = sphi 0, %s41
      %s45 = sphi 0, %s44
      %s61 = sphi 0, %s45
      %s67 = sphi 0, %s69
      %s70 = sphi 0, %s67
      %s71 = sphi 0, %s70
      %s87 = sphi 0, %s71
      %s95 = sphi 0, %s97
      %s98 = sphi 0, %s95
      %s99 = sphi 0, %s98
      %s115 = sphi 0, %s99
    $region4: #{tpu_custom_call.1} parent=1 // loop_header_branch
      %20 = sbr.rel (%p18) target = $region8
    $region5: #{tpu_custom_call.1} parent=1 // loop_body
      %s22 = ssub.s32 %s17, 1
      %s23 = ssub.s32 %s17, 2
      %s30 = sadd.s32 1, %s25
      %p31 = scmp.ge.s32.totalorder %s30, 1
      %s32 = scalar_select %p31, 0, %s30
      %s33 = sadd.s32 1, %s24
      %s34 = scalar_select %p31, %s33, %s24
      %p35 = scmp.ge.s32.totalorder %s34, 2
      %s36 = scalar_select %p35, 0, %s34
      %s37 = ssub.s32 %s25, %s32
      %s38 = ssub.s32 %s24, %s36
      %s39 = sor.u32 %s37, %s38
      %p40 = scmp.eq.s32.totalorder %s39, 0
      %s42 = sadd.s32 %s41, 1
      %s43 = scalar_select %p40, %s41, %s42
      %p46 = pneg %p40
      %p47 = scmp.eq.s32.totalorder %s17, 1
      %p48 = por %p46, %p47
      %p49 = scmp.ne.s32.totalorder %s41, %s44
      %p50 = scmp.eq.s32.totalorder %s17, 0
      %p51 = por %p49, %p50
      %p52 = scmp.ne.s32.totalorder %s41, %s44
      %p53 = scmp.eq.s32.totalorder %s22, 1
      %p54 = por %p52, %p53
      %p55 = scmp.ne.s32.totalorder %s44, %s45
      %p56 = scmp.eq.s32.totalorder %s22, 0
      %p57 = por %p55, %p56
      %p58 = scmp.ne.s32.totalorder %s44, %s45
      %p59 = scmp.eq.s32.totalorder %s23, 1
      %p60 = por %p58, %p59
      %p62 = scmp.ne.s32.totalorder %s45, %s61
      %p63 = scmp.eq.s32.totalorder %s23, 0
      %p64 = por %p62, %p63
      %s65 = ssub.s32 %s24, %s36
      %p66 = scmp.eq.s32.totalorder %s65, 0
      %s68 = sadd.s32 %s67, 1
      %s69 = scalar_select %p66, %s67, %s68
      %p72 = pneg %p66
      %p73 = scmp.eq.s32.totalorder %s17, 1
      %p74 = por %p72, %p73
      %p75 = scmp.ne.s32.totalorder %s67, %s70
      %p76 = scmp.eq.s32.totalorder %s17, 0
      %p77 = por %p75, %p76
      %p78 = scmp.ne.s32.totalorder %s67, %s70
      %p79 = scmp.eq.s32.totalorder %s22, 1
      %p80 = por %p78, %p79
      %p81 = scmp.ne.s32.totalorder %s70, %s71
      %p82 = scmp.eq.s32.totalorder %s22, 0
      %p83 = por %p81, %p82
      %p84 = scmp.ne.s32.totalorder %s70, %s71
      %p85 = scmp.eq.s32.totalorder %s23, 1
      %p86 = por %p84, %p85
      %p88 = scmp.ne.s32.totalorder %s71, %s87
      %p89 = scmp.eq.s32.totalorder %s23, 0
      %p90 = por %p88, %p89
      %s91 = ssub.s32 %s25, %s32
      %s92 = ssub.s32 %s24, %s36
      %s93 = sor.u32 %s91, %s92
      %p94 = scmp.eq.s32.totalorder %s93, 0
      %s96 = sadd.s32 %s95, 1
      %s97 = scalar_select %p94, %s95, %s96
      %p100 = pneg %p94
      %p101 = scmp.eq.s32.totalorder %s17, 1
      %p102 = por %p100, %p101
      %p103 = scmp.ne.s32.totalorder %s95, %s98
      %p104 = scmp.eq.s32.totalorder %s17, 0
      %p105 = por %p103, %p104
      %p106 = scmp.ne.s32.totalorder %s95, %s98
      %p107 = scmp.eq.s32.totalorder %s22, 1
      %p108 = por %p106, %p107
      %p109 = scmp.ne.s32.totalorder %s98, %s99
      %p110 = scmp.eq.s32.totalorder %s22, 0
      %p111 = por %p109, %p110
      %p112 = scmp.ne.s32.totalorder %s98, %s99
      %p113 = scmp.eq.s32.totalorder %s23, 1
      %p114 = por %p112, %p113
      %p116 = scmp.ne.s32.totalorder %s99, %s115
      %p117 = scmp.eq.s32.totalorder %s23, 0
      %p118 = por %p116, %p117
      %p119 = scmp.le.s32.totalorder 1, %s17
      %p120 = scmp.lt.s32.totalorder %s17, 3
      %p121 = pnand %p119, %p120
      %p122 = pneg %p121
      // Predicated region
      $region9: #{tpu_custom_call.1} parent=5 // pred_check
        _
      $region10: #{tpu_custom_call.1} parent=5 // pred_check_branch
        %124 = sbr.rel (%p121) target = $region12
      $region11: #{tpu_custom_call.1} parent=5 // pred_region
        %s125 = ssub.s32 %s17, 1
      $region12: #{tpu_custom_call.1} parent=5 // pred_fallthru
        _
      %p126 = scmp.lt.s32.totalorder %s17, 2
      // Predicated region
      $region13: #{tpu_custom_call.1} parent=5 // pred_check
        %p127 = pneg %p126
      $region14: #{tpu_custom_call.1} parent=5 // pred_check_branch
        %129 = sbr.rel (%p127) target = $region16
      $region15: #{tpu_custom_call.1} parent=5 // pred_region
        // Predicated region
        $region17: #{tpu_custom_call.1} parent=15 // pred_check
          %p130 = pneg %p51
        $region18: #{tpu_custom_call.1} parent=15 // pred_check_branch
          %132 = sbr.rel (%p130) target = $region20
        $region19: #{tpu_custom_call.1} parent=15 // pred_region
          %s133 = sand.u32 %s41, 1
          %s134 = scalar_lea.sflag [#allocation3], %s133
          %s135 = sand.u32 %s41, 1
          %s136 = smul.addr %s135, 2
          %s137 = scalar_lea.vmem [#allocation2], %s136
          %s139 = ssub.s32 32, 32
          %140 = vsyncadd %s134, %s139
          %s141 = smul.addr %s25, 2
          %s142 = sadd.s32 %s24, %s141
          %s143 = smul.addr %s142, 32
          %s144 = scalar_lea.hbm %s0, %s143
          %s146 = sshll.u32 %s137, 4
          %s147 = int_to_ptr.vmem [resolvable:$true] %s146
          %149 = dma.hbm_to_vmem [thread:$0]  %s144, 32, %s147, %s134
        $region20: #{tpu_custom_call.1} parent=15 // pred_fallthru
          _
        // Predicated region
        $region21: #{tpu_custom_call.1} parent=15 // pred_check
          %p150 = pneg %p77
        $region22: #{tpu_custom_call.1} parent=15 // pred_check_branch
          %152 = sbr.rel (%p150) target = $region24
        $region23: #{tpu_custom_call.1} parent=15 // pred_region
          %s153 = sand.u32 %s67, 1
          %s154 = scalar_lea.sflag [#allocation6], %s153
          %s155 = sand.u32 %s67, 1
          %s156 = scalar_lea.vmem [#allocation5], %s155
          %s158 = ssub.s32 16, 16
          %159 = vsyncadd %s154, %s158
          %s160 = smul.addr %s24, 16
          %s161 = scalar_lea.hbm %s1, %s160
          %s163 = sshll.u32 %s156, 4
          %s164 = int_to_ptr.vmem [resolvable:$true] %s163
          %166 = dma.hbm_to_vmem [thread:$0]  %s161, 16, %s164, %s154
        $region24: #{tpu_custom_call.1} parent=15 // pred_fallthru
          _
      $region16: #{tpu_custom_call.1} parent=5 // pred_fallthru
        _
      %p167 = scmp.le.s32.totalorder 1, %s17
      %p168 = scmp.lt.s32.totalorder %s17, 3
      %p169 = pnand %p167, %p168
      %p170 = pneg %p169
      // Predicated region
      $region25: #{tpu_custom_call.1} parent=5 // pred_check
        _
      $region26: #{tpu_custom_call.1} parent=5 // pred_check_branch
        %172 = sbr.rel (%p169) target = $region28
      $region27: #{tpu_custom_call.1} parent=5 // pred_region
        %s173 = ssub.s32 %s17, 1
        %s174 = sand.u32 %s44, 1
        %s175 = scalar_lea.sflag [#allocation3], %s174
        %s176 = sand.u32 %s44, 1
        %s177 = smul.addr %s176, 2
        %s178 = scalar_lea.vmem [#allocation2], %s177
        // Predicated region
        $region29: #{tpu_custom_call.1} parent=27 // pred_check
          %p179 = pneg %p57
        $region30: #{tpu_custom_call.1} parent=27 // pred_check_branch
          %181 = sbr.rel (%p179) target = $region32
        $region31: #{tpu_custom_call.1} parent=27 // pred_region
          %182 = dma.done %s175, 32
        $region32: #{tpu_custom_call.1} parent=27 // pred_fallthru
          _
        %s183 = sand.u32 %s70, 1
        %s184 = scalar_lea.sflag [#allocation6], %s183
        %s185 = sand.u32 %s70, 1
        %s186 = scalar_lea.vmem [#allocation5], %s185
        // Predicated region
        $region33: #{tpu_custom_call.1} parent=27 // pred_check
          %p187 = pneg %p83
        $region34: #{tpu_custom_call.1} parent=27 // pred_check_branch
          %189 = sbr.rel (%p187) target = $region36
        $region35: #{tpu_custom_call.1} parent=27 // pred_region
          %190 = dma.done %s184, 16
        $region36: #{tpu_custom_call.1} parent=27 // pred_fallthru
          _
        %s191 = sand.u32 %s44, 1
        %s192 = scalar_lea.sflag [#allocation3], %s191
        %s193 = sand.u32 %s44, 1
        %s194 = smul.addr %s193, 2
        %s195 = scalar_lea.vmem [#allocation2], %s194
        %p196 = pneg %p57
        %p197 = pneg %p54
        %s198 = sand.u32 %s70, 1
        %s199 = scalar_lea.sflag [#allocation6], %s198
        %s200 = sand.u32 %s70, 1
        %s201 = scalar_lea.vmem [#allocation5], %s200
        %p202 = pneg %p83
        %p203 = pneg %p80
        %p204 = pneg %p111
        %p205 = pneg %p108
        %s206 = sand.u32 %s98, 1
        %s207 = scalar_lea.sflag [#allocation4], %s206
        %s208 = sand.u32 %s98, 1
        %s209 = smul.addr %s208, 2
        %s210 = scalar_lea.vmem [#allocation7], %s209
        %v211 = vld [vmem:[%s178] sm:$0x3]
        %v212 = vld [vmem:[%s186] sm:$0x1]
        %v214 = vlaneseq
        %v215 = vshrl.u32 %v214, 7
        %v216 = vsub.s32 0, %v215
        %v217 = vrot.slane %v212, %v216
        %v219 = vadd.f32 %v211, %v217
        %220 = vst [vmem:[%s210] sm:$0x3] %v219
        %s221 = sand.u32 %s98, 1
        %s222 = scalar_lea.sflag [#allocation4], %s221
        %s223 = sand.u32 %s98, 1
        %s224 = smul.addr %s223, 2
        %s225 = scalar_lea.vmem [#allocation7], %s224
        // Predicated region
        $region37: #{tpu_custom_call.1} parent=27 // pred_check
          %p226 = pneg %p108
        $region38: #{tpu_custom_call.1} parent=27 // pred_check_branch
          %228 = sbr.rel (%p226) target = $region40
        $region39: #{tpu_custom_call.1} parent=27 // pred_region
          %s230 = ssub.s32 32, 32
          %231 = vsyncadd %s222, %s230
          %s232 = smul.addr %s27, 2
          %s233 = sadd.s32 %s26, %s232
          %s234 = smul.addr %s233, 32
          %s235 = scalar_lea.hbm %s2, %s234
          %s237 = sshll.u32 %s225, 4
          %s238 = int_to_ptr.vmem [resolvable:$true] %s237
          %240 = dma.vmem_to_hbm [thread:$0]  %s238, 32, %s235, %s222
        $region40: #{tpu_custom_call.1} parent=27 // pred_fallthru
          _
      $region28: #{tpu_custom_call.1} parent=5 // pred_fallthru
        _
      %p241 = scmp.le.s32.totalorder 2, %s17
      // Predicated region
      $region41: #{tpu_custom_call.1} parent=5 // pred_check
        %p242 = pneg %p241
      $region42: #{tpu_custom_call.1} parent=5 // pred_check_branch
        %244 = sbr.rel (%p242) target = $region44
      $region43: #{tpu_custom_call.1} parent=5 // pred_region
        %s245 = ssub.s32 %s17, 2
        // Predicated region
        $region45: #{tpu_custom_call.1} parent=43 // pred_check
          %p246 = pneg %p114
        $region46: #{tpu_custom_call.1} parent=43 // pred_check_branch
          %248 = sbr.rel (%p246) target = $region48
        $region47: #{tpu_custom_call.1} parent=43 // pred_region
          %s249 = sand.u32 %s99, 1
          %s250 = scalar_lea.sflag [#allocation4], %s249
          %s251 = sand.u32 %s99, 1
          %s252 = smul.addr %s251, 2
          %s253 = scalar_lea.vmem [#allocation7], %s252
          %254 = dma.done %s250, 32
        $region48: #{tpu_custom_call.1} parent=43 // pred_fallthru
          _
      $region44: #{tpu_custom_call.1} parent=5 // pred_fallthru
        _
    $region6: #{tpu_custom_call.1} parent=1 // loop_footer
      %s21 = sadd.s32 1, %s17
    $region7: #{tpu_custom_call.1} parent=1 // loop_footer_branch
      %16 = sbr.rel target = $region3
    $region8: #{tpu_custom_call.1} parent=1 // loop_exit
      _
    %255 = vsyncpa [#allocation3], 1
    %s256 = scalar_lea.sflag [#allocation3], 1
    %257 = vsyncpa %s256, 1
    %258 = vsyncpa [#allocation6], 1
    %s259 = scalar_lea.sflag [#allocation6], 1
    %260 = vsyncpa %s259, 1
    %261 = vsyncpa [#allocation4], 1
    %s262 = scalar_lea.sflag [#allocation4], 1
    %263 = vsyncpa %s262, 1

</llo_original>
